<compile_context>
chip_gen: v5e
topology: v5e:2x2
jax: 0.10.0
libtpu: 0.0.40
codegen_flags: <defaults>
</compile_context>

<pallas_src>
import functools

import jax
import jax.numpy as jnp
from jax.experimental import pallas as pl
from jax.experimental.pallas import tpu as pltpu

LEAKY_SLOPE = 0.01   # torch.nn.LeakyReLU default negative_slope
LANE = 128           # lane width
BTILE = 16           # batch-tile granularity (bf16 packs 16 rows per sublane tile)


def _round_up(n, m):
    return ((n + m - 1) // m) * m


def _cdiv(a, b):
    return -(-a // b)


def _pad2d(a, rows, cols):
    return jnp.pad(a, ((0, rows - a.shape[0]), (0, cols - a.shape[1])))


def _mlp_kernel(x_ref, w1_ref, b1_ref, w2_ref, b2_ref, w3_ref, b3_ref, o_ref):
    # x block arrives as f32 straight from HBM; the bf16 cast for the MXU is
    # free VPU filler here (saves a full activation HBM round-trip vs casting
    # in the wrapper).
    x = x_ref[...].astype(jnp.bfloat16)

    # fc1 + LeakyReLU (bf16 MXU operands, f32 accumulation + elementwise).
    h1 = jnp.dot(x, w1_ref[...], preferred_element_type=jnp.float32) + b1_ref[...]
    h1 = jnp.where(h1 > 0, h1, LEAKY_SLOPE * h1)

    # nn.Dropout is identity in eval/inference mode.
    # TODO(synk): training-mode dropout (scaled Bernoulli mask via pltpu.prng_*) not emitted.

    # fc2 + LeakyReLU
    h2 = jnp.dot(h1.astype(jnp.bfloat16), w2_ref[...],
                 preferred_element_type=jnp.float32) + b2_ref[...]
    h2 = jnp.where(h2 > 0, h2, LEAKY_SLOPE * h2)

    # fc3 + numerically stable sigmoid (exp + reciprocal both on the EUP slot).
    h3 = jnp.dot(h2.astype(jnp.bfloat16), w3_ref[...],
                 preferred_element_type=jnp.float32) + b3_ref[...]
    e = jnp.exp(-jnp.abs(h3))                       # in (0, 1]
    p = pl.reciprocal(1.0 + e, approx=True)         # denominator in (1, 2] -> safe
    o_ref[...] = jnp.where(h3 >= 0.0, p, 1.0 - p)


def prepare_params(params):
    """One-time pad (lane-dense) + bf16 cast of weights, f32 biases.

    Hoisted out of the forward path so it does not re-execute on every call.
    """
    w1, b1, w2, b2, w3, b3 = params
    in_dim, hid1 = w1.shape
    hid2 = w2.shape[1]
    out_dim = w3.shape[1]
    D0 = _round_up(in_dim, LANE)
    D1 = _round_up(hid1, LANE)
    D2 = _round_up(hid2, LANE)
    D3 = _round_up(out_dim, LANE)

    prepared = (
        _pad2d(w1, D0, D1).astype(jnp.bfloat16),
        _pad2d(b1, 1, D1).astype(jnp.float32),
        _pad2d(w2, D1, D2).astype(jnp.bfloat16),
        _pad2d(b2, 1, D2).astype(jnp.float32),
        _pad2d(w3, D2, D3).astype(jnp.bfloat16),
        _pad2d(b3, 1, D3).astype(jnp.float32),
    )
    prepared = jax.tree_util.tree_map(jax.device_put, prepared)
    return prepared, out_dim


@functools.partial(jax.jit, static_argnames=("out_dim", "block_b"))
def mlp_forward(x, prepared, *, out_dim, block_b=512):
    """Fused MLP forward. x: (B, in_dim) f32; prepared from prepare_params()."""
    w1_p, b1_p, w2_p, b2_p, w3_p, b3_p = prepared
    B, in_dim = x.shape
    D0, D1 = w1_p.shape
    D2 = w2_p.shape[1]
    D3 = w3_p.shape[1]

    # Batch tile: multiple of 16, bounded padding (at most one tile of waste),
    # and >= 2 grid steps when the batch is large enough so both TensorCores
    # on a v7x megacore get work.
    n_steps = _cdiv(B, block_b)
    if B >= 2 * BTILE:
        n_steps = max(n_steps, 2)
    TB = _round_up(_cdiv(B, n_steps), BTILE)
    B_pad = _round_up(B, TB)
    grid = (B_pad // TB,)

    # x stays f32 (cast to bf16 in-kernel); only pad when shapes require it.
    x_p = x if (B_pad, D0) == (B, in_dim) else _pad2d(x, B_pad, D0)

    # VMEM budget: bf16 weights single-buffered + f32 biases + double-buffered
    # x/out blocks + f32 intermediates, with headroom; capped at v7x physical.
    weight_bytes = (D0 * D1 + D1 * D2 + D2 * D3) * 2
    bias_bytes = 8 * (D1 + D2 + D3) * 4
    io_bytes = 2 * TB * (D0 + D3) * 4
    inter_bytes = TB * (D1 + D2 + D3) * 4
    vmem_limit = int(1.5 * (weight_bytes + bias_bytes + io_bytes + inter_bytes))
    vmem_limit = min(max(vmem_limit, 8 * 1024 * 1024), 64 * 1024 * 1024)
    # TODO(synk): if the bf16 weights alone exceed ~48 MiB (v7x has 64 MiB/TC),
    # split the widest layer over an output-feature grid axis or run each
    # matmul via pltpu.emit_pipeline over K instead of keeping it resident.

    cost = pl.CostEstimate(
        flops=2 * B_pad * (D0 * D1 + D1 * D2 + D2 * D3),
        transcendentals=2 * B_pad * D3,
        bytes_accessed=(x_p.size * 4 + weight_bytes + bias_bytes + B_pad * D3 * 4),
    )

    def resident(shape):
        # Constant index_map -> stays VMEM-resident; single buffer (no re-DMA).
        return pl.BlockSpec(shape, lambda i: (0, 0), pipeline_mode=pl.Buffered(1))

    out_padded = pl.pallas_call(
        _mlp_kernel,
        out_shape=jax.ShapeDtypeStruct((B_pad, D3), jnp.float32),
        grid=grid,
        in_specs=[
            pl.BlockSpec((TB, D0), lambda i: (i, 0)),   # x: batch-tiled, pipelined
            resident((D0, D1)), resident((1, D1)),      # fc1 weight / bias
            resident((D1, D2)), resident((1, D2)),      # fc2 weight / bias
            resident((D2, D3)), resident((1, D3)),      # fc3 weight / bias
        ],
        out_specs=pl.BlockSpec((TB, D3), lambda i: (i, 0)),
        compiler_params=pltpu.CompilerParams(
            dimension_semantics=("parallel",),          # shard batch across TCs
            vmem_limit_bytes=vmem_limit,
        ),
        cost_estimate=cost,
    )(x_p, w1_p, b1_p, w2_p, b2_p, w3_p, b3_p)

    return out_padded[:B, :out_dim]


def init_params(key, in_dim, hidden_dim, hidden_dim1, out_dim):
    """Deterministic init mirroring nn.Linear's U(-1/sqrt(fan_in), 1/sqrt(fan_in)).
    Weights are stored as (in_features, out_features); biases as (1, out_features)."""
    ks = jax.random.split(key, 6)

    def linear(kw, kb, fan_in, fan_out):
        bound = 1.0 / jnp.sqrt(fan_in)
        w = jax.random.uniform(kw, (fan_in, fan_out), jnp.float32, -bound, bound)
        b = jax.random.uniform(kb, (1, fan_out), jnp.float32, -bound, bound)
        return w, b

    w1, b1 = linear(ks[0], ks[1], in_dim, hidden_dim)
    w2, b2 = linear(ks[2], ks[3], hidden_dim, hidden_dim1)
    w3, b3 = linear(ks[4], ks[5], hidden_dim1, out_dim)
    return (w1, b1, w2, b2, w3, b3)


if __name__ == "__main__":
    in_dim, hidden_dim, hidden_dim1, out_dim = 32, 64, 32, 16
    batch = 8

    key = jax.random.PRNGKey(0)
    kx, kp = jax.random.split(key)
    x = jax.random.normal(kx, (batch, in_dim), dtype=jnp.float32)
    params = init_params(kp, in_dim, hidden_dim, hidden_dim1, out_dim)

    prepared, out_dim_p = prepare_params(params)   # one-time pad + bf16 cast
    out = mlp_forward(x, prepared, out_dim=out_dim_p)
    jax.block_until_ready(out)

    # sanity: shape, finiteness, sigmoid output range
    assert out.shape == (batch, out_dim)
    assert bool(jnp.all(jnp.isfinite(out)))
    assert bool(jnp.all((out >= 0.0) & (out <= 1.0)))
    print("KERNEL_OK")
</pallas_src>

<mosaic_0001>
module attributes {stable_mosaic.version = 11 : i64} {
  func.func @_mlp_kernel(%arg0: i32, %arg1: memref<16x128xf32, #tpu.memory_space<vmem>>, %arg2: memref<128x128xbf16, #tpu.memory_space<vmem>>, %arg3: memref<1x128xf32, #tpu.memory_space<vmem>>, %arg4: memref<128x128xbf16, #tpu.memory_space<vmem>>, %arg5: memref<1x128xf32, #tpu.memory_space<vmem>>, %arg6: memref<128x128xbf16, #tpu.memory_space<vmem>>, %arg7: memref<1x128xf32, #tpu.memory_space<vmem>>, %arg8: memref<16x128xf32, #tpu.memory_space<vmem>>) attributes {dimension_semantics = [#tpu.dimension_semantics<parallel>], iteration_bounds = array<i64: 1>, scalar_prefetch = 0 : i64, scratch_operands = 0 : i64, tpu.core_type = #tpu.core_type<tc>, window_params = [{transform_indices = @transform_0, window_bounds = array<i64: 16, 128>}, {pipeline_mode = #tpu.pipeline_mode<synchronous>, transform_indices = @transform_1, window_bounds = array<i64: 128, 128>}, {pipeline_mode = #tpu.pipeline_mode<synchronous>, transform_indices = @transform_2, window_bounds = array<i64: 1, 128>}, {pipeline_mode = #tpu.pipeline_mode<synchronous>, transform_indices = @transform_3, window_bounds = array<i64: 128, 128>}, {pipeline_mode = #tpu.pipeline_mode<synchronous>, transform_indices = @transform_4, window_bounds = array<i64: 1, 128>}, {pipeline_mode = #tpu.pipeline_mode<synchronous>, transform_indices = @transform_5, window_bounds = array<i64: 128, 128>}, {pipeline_mode = #tpu.pipeline_mode<synchronous>, transform_indices = @transform_6, window_bounds = array<i64: 1, 128>}, {transform_indices = @transform_7, window_bounds = array<i64: 16, 128>}]} {
    %c0 = arith.constant 0 : index
    %c0_0 = arith.constant 0 : index
    %0 = vector.load %arg1[%c0, %c0_0] : memref<16x128xf32, #tpu.memory_space<vmem>>, vector<16x128xf32>
    %1 = arith.truncf %0 : vector<16x128xf32> to vector<16x128xbf16>
    %c0_1 = arith.constant 0 : index
    %c0_2 = arith.constant 0 : index
    %2 = vector.load %arg2[%c0_1, %c0_2] : memref<128x128xbf16, #tpu.memory_space<vmem>>, vector<128x128xbf16>
    %cst = arith.constant dense<0.000000e+00> : vector<16x128xf32>
    %3 = tpu.matmul %1, %2, %cst {dimension_numbers = #tpu.dot_dimension_numbers<[1], [0], [0], [1], [0, 0, 1, 1], [], []>} : vector<16x128xbf16>, vector<128x128xbf16>, vector<16x128xf32> -> vector<16x128xf32>
    %c0_3 = arith.constant 0 : index
    %c0_4 = arith.constant 0 : index
    %4 = vector.load %arg3[%c0_3, %c0_4] : memref<1x128xf32, #tpu.memory_space<vmem>>, vector<1x128xf32>
    %5 = vector.broadcast %4 : vector<1x128xf32> to vector<16x128xf32>
    %6 = arith.addf %3, %5 : vector<16x128xf32>
    %cst_5 = arith.constant 0.000000e+00 : f32
    %7 = vector.broadcast %cst_5 : f32 to vector<16x128xf32>
    %8 = arith.cmpf ogt, %6, %7 : vector<16x128xf32>
    %cst_6 = arith.constant 0.00999999977 : f32
    %9 = vector.broadcast %cst_6 : f32 to vector<16x128xf32>
    %10 = arith.mulf %9, %6 : vector<16x128xf32>
    %11 = arith.select %8, %6, %10 : vector<16x128xi1>, vector<16x128xf32>
    %12 = arith.truncf %11 : vector<16x128xf32> to vector<16x128xbf16>
    %c0_7 = arith.constant 0 : index
    %c0_8 = arith.constant 0 : index
    %13 = vector.load %arg4[%c0_7, %c0_8] : memref<128x128xbf16, #tpu.memory_space<vmem>>, vector<128x128xbf16>
    %cst_9 = arith.constant dense<0.000000e+00> : vector<16x128xf32>
    %14 = tpu.matmul %12, %13, %cst_9 {dimension_numbers = #tpu.dot_dimension_numbers<[1], [0], [0], [1], [0, 0, 1, 1], [], []>} : vector<16x128xbf16>, vector<128x128xbf16>, vector<16x128xf32> -> vector<16x128xf32>
    %c0_10 = arith.constant 0 : index
    %c0_11 = arith.constant 0 : index
    %15 = vector.load %arg5[%c0_10, %c0_11] : memref<1x128xf32, #tpu.memory_space<vmem>>, vector<1x128xf32>
    %16 = vector.broadcast %15 : vector<1x128xf32> to vector<16x128xf32>
    %17 = arith.addf %14, %16 : vector<16x128xf32>
    %cst_12 = arith.constant 0.000000e+00 : f32
    %18 = vector.broadcast %cst_12 : f32 to vector<16x128xf32>
    %19 = arith.cmpf ogt, %17, %18 : vector<16x128xf32>
    %cst_13 = arith.constant 0.00999999977 : f32
    %20 = vector.broadcast %cst_13 : f32 to vector<16x128xf32>
    %21 = arith.mulf %20, %17 : vector<16x128xf32>
    %22 = arith.select %19, %17, %21 : vector<16x128xi1>, vector<16x128xf32>
    %23 = arith.truncf %22 : vector<16x128xf32> to vector<16x128xbf16>
    %c0_14 = arith.constant 0 : index
    %c0_15 = arith.constant 0 : index
    %24 = vector.load %arg6[%c0_14, %c0_15] : memref<128x128xbf16, #tpu.memory_space<vmem>>, vector<128x128xbf16>
    %cst_16 = arith.constant dense<0.000000e+00> : vector<16x128xf32>
    %25 = tpu.matmul %23, %24, %cst_16 {dimension_numbers = #tpu.dot_dimension_numbers<[1], [0], [0], [1], [0, 0, 1, 1], [], []>} : vector<16x128xbf16>, vector<128x128xbf16>, vector<16x128xf32> -> vector<16x128xf32>
    %c0_17 = arith.constant 0 : index
    %c0_18 = arith.constant 0 : index
    %26 = vector.load %arg7[%c0_17, %c0_18] : memref<1x128xf32, #tpu.memory_space<vmem>>, vector<1x128xf32>
    %27 = vector.broadcast %26 : vector<1x128xf32> to vector<16x128xf32>
    %28 = arith.addf %25, %27 : vector<16x128xf32>
    %29 = math.absf %28 : vector<16x128xf32>
    %cst_19 = arith.constant 0.000000e+00 : f32
    %30 = vector.broadcast %cst_19 : f32 to vector<16x128xf32>
    %31 = arith.subf %30, %29 : vector<16x128xf32>
    %32 = math.exp %31 : vector<16x128xf32>
    %cst_20 = arith.constant 1.000000e+00 : f32
    %33 = vector.broadcast %cst_20 : f32 to vector<16x128xf32>
    %34 = arith.addf %33, %32 : vector<16x128xf32>
    %35 = tpu.reciprocal %34 {approx = true} : vector<16x128xf32> -> vector<16x128xf32>
    %cst_21 = arith.constant 0.000000e+00 : f32
    %36 = vector.broadcast %cst_21 : f32 to vector<16x128xf32>
    %37 = arith.cmpf oge, %28, %36 : vector<16x128xf32>
    %cst_22 = arith.constant 1.000000e+00 : f32
    %38 = vector.broadcast %cst_22 : f32 to vector<16x128xf32>
    %39 = arith.subf %38, %35 : vector<16x128xf32>
    %40 = arith.select %37, %35, %39 : vector<16x128xi1>, vector<16x128xf32>
    %c0_23 = arith.constant 0 : index
    %c0_24 = arith.constant 0 : index
    %41 = vector.load %arg8[%c0_23, %c0_24] : memref<16x128xf32, #tpu.memory_space<vmem>>, vector<16x128xf32>
    tpu.vector_store %arg8[%c0_23, %c0_24], %40 {strides = array<i32>} : memref<16x128xf32, #tpu.memory_space<vmem>>, vector<16x128xf32>,
    return
  }
  func.func @transform_0(%arg0: i32) -> (i32, i32) {
    %c0_i32 = arith.constant 0 : i32
    %c0_i32_0 = arith.constant 0 : i32
    return %arg0, %c0_i32 : i32, i32
  }
  func.func @transform_1(%arg0: i32) -> (i32, i32) {
    %c0_i32 = arith.constant 0 : i32
    %c0_i32_0 = arith.constant 0 : i32
    %c0_i32_1 = arith.constant 0 : i32
    return %c0_i32, %c0_i32_0 : i32, i32
  }
  func.func @transform_2(%arg0: i32) -> (i32, i32) {
    %c0_i32 = arith.constant 0 : i32
    %c0_i32_0 = arith.constant 0 : i32
    %c0_i32_1 = arith.constant 0 : i32
    return %c0_i32, %c0_i32_0 : i32, i32
  }
  func.func @transform_3(%arg0: i32) -> (i32, i32) {
    %c0_i32 = arith.constant 0 : i32
    %c0_i32_0 = arith.constant 0 : i32
    %c0_i32_1 = arith.constant 0 : i32
    return %c0_i32, %c0_i32_0 : i32, i32
  }
  func.func @transform_4(%arg0: i32) -> (i32, i32) {
    %c0_i32 = arith.constant 0 : i32
    %c0_i32_0 = arith.constant 0 : i32
    %c0_i32_1 = arith.constant 0 : i32
    return %c0_i32, %c0_i32_0 : i32, i32
  }
  func.func @transform_5(%arg0: i32) -> (i32, i32) {
    %c0_i32 = arith.constant 0 : i32
    %c0_i32_0 = arith.constant 0 : i32
    %c0_i32_1 = arith.constant 0 : i32
    return %c0_i32, %c0_i32_0 : i32, i32
  }
  func.func @transform_6(%arg0: i32) -> (i32, i32) {
    %c0_i32 = arith.constant 0 : i32
    %c0_i32_0 = arith.constant 0 : i32
    %c0_i32_1 = arith.constant 0 : i32
    return %c0_i32, %c0_i32_0 : i32, i32
  }
  func.func @transform_7(%arg0: i32) -> (i32, i32) {
    %c0_i32 = arith.constant 0 : i32
    %c0_i32_0 = arith.constant 0 : i32
    return %arg0, %c0_i32 : i32, i32
  }
}

</mosaic_0001>

<llo_original>
// kernel: mlp_forward.1
$region0: #{mlp_forward.1}
  #allocation0 [shape = 'u32[]', space=smem, size = 0x4, offset = 0x4, fixed_abs, tag = 'smem constant byte address 0x4 - core index']
  #allocation1 [shape = 'u32[72,128]{1,0:T(1,128)}', space=vmem, size = 0x9000, scoped, tag = 'internal scratch']
  %s0 = inlined_call_operand.vmem [shape: f32[16,128], index: 0, kind: input, shape index: {}]
  %s1 = inlined_call_operand.hbm [shape: bf16[128,128], index: 1, kind: input, shape index: {}]
  %s2 = inlined_call_operand.vmem [shape: f32[1,128], index: 2, kind: input, shape index: {}]
  %s3 = inlined_call_operand.hbm [shape: bf16[128,128], index: 3, kind: input, shape index: {}]
  %s4 = inlined_call_operand.vmem [shape: f32[1,128], index: 4, kind: input, shape index: {}]
  %s5 = inlined_call_operand.hbm [shape: bf16[128,128], index: 5, kind: input, shape index: {}]
  %s6 = inlined_call_operand.vmem [shape: f32[1,128], index: 6, kind: input, shape index: {}]
  %s7 = inlined_call_operand.vmem [shape: f32[16,128], index: 7, kind: output, shape index: {}]
  %s8 = sld [smem:[#allocation0]]
  $region50: #{mlp_forward.1} parent=0
    _
  %s10 = ssub.s32 1, %s8
  %s11 = scalar_select 0, %s10, %s8
  $region1: #{mlp_forward.1} parent=0
    #allocation2 [shape = 'u8[32768]{0}', space=vmem, size = 0x8000, scoped, tag = 'input window, operand 1, single buffered']
    #allocation3 [shape = 's32[1]{0}', space=sflag, size = 0x4, scoped, tag = 'scoped memory for mlp_forward.1']
    #allocation4 [shape = 'u8[32768]{0}', space=vmem, size = 0x8000, scoped, tag = 'input window, operand 3, single buffered']
    #allocation5 [shape = 's32[1]{0}', space=sflag, size = 0x4, scoped, tag = 'scoped memory for mlp_forward.1']
    #allocation6 [shape = 'u8[32768]{0}', space=vmem, size = 0x8000, scoped, tag = 'input window, operand 5, single buffered']
    %12 = vsyncpa [#allocation3], 0
    %13 = vsyncpa [#allocation5], 0
    // Predicated region
    $region2: #{mlp_forward.1} parent=1 // pred_check
      _
    $region3: #{mlp_forward.1} parent=1 // pred_check_branch
      %15 = sbr.rel (0) target = $region5
    $region4: #{mlp_forward.1} parent=1 // pred_region
      _
    $region5: #{mlp_forward.1} parent=1 // pred_fallthru
      _
    // Predicated region
    $region6: #{mlp_forward.1} parent=1 // pred_check
      _
    $region7: #{mlp_forward.1} parent=1 // pred_check_branch
      %17 = sbr.rel (0) target = $region9
    $region8: #{mlp_forward.1} parent=1 // pred_region
      %19 = vsyncadd [#allocation3], 0
      %s20 = sshll.u32 %s1, 4
      %s21 = int_to_ptr.hbm [resolvable:$true] %s20
      %s22 = sshll.u32 [#allocation2], 4
      %s23 = int_to_ptr.vmem [resolvable:$true] %s22
      %28 = dma.hbm_to_vmem [thread:$0]  %s21, 1024, %s23, [#allocation3], 64, 64, 4
    $region9: #{mlp_forward.1} parent=1 // pred_fallthru
      _
    // Predicated region
    $region10: #{mlp_forward.1} parent=1 // pred_check
      _
    $region11: #{mlp_forward.1} parent=1 // pred_check_branch
      %30 = sbr.rel (0) target = $region13
    $region12: #{mlp_forward.1} parent=1 // pred_region
      _
    $region13: #{mlp_forward.1} parent=1 // pred_fallthru
      _
    // Predicated region
    $region14: #{mlp_forward.1} parent=1 // pred_check
      _
    $region15: #{mlp_forward.1} parent=1 // pred_check_branch
      %32 = sbr.rel (0) target = $region17
    $region16: #{mlp_forward.1} parent=1 // pred_region
      %34 = vsyncadd [#allocation5], 0
      %s35 = sshll.u32 %s3, 4
      %s36 = int_to_ptr.hbm [resolvable:$true] %s35
      %s37 = sshll.u32 [#allocation4], 4
      %s38 = int_to_ptr.vmem [resolvable:$true] %s37
      %43 = dma.hbm_to_vmem [thread:$0]  %s36, 1024, %s38, [#allocation5], 64, 64, 4
    $region17: #{mlp_forward.1} parent=1 // pred_fallthru
      _
    // Predicated region
    $region18: #{mlp_forward.1} parent=1 // pred_check
      _
    $region19: #{mlp_forward.1} parent=1 // pred_check_branch
      %45 = sbr.rel (0) target = $region21
    $region20: #{mlp_forward.1} parent=1 // pred_region
      _
    $region21: #{mlp_forward.1} parent=1 // pred_fallthru
      _
    // Predicated region
    $region22: #{mlp_forward.1} parent=1 // pred_check
      _
    $region23: #{mlp_forward.1} parent=1 // pred_check_branch
      %47 = sbr.rel (0) target = $region25
    $region24: #{mlp_forward.1} parent=1 // pred_region
      %49 = vsyncadd [#allocation5], 0
      %s50 = sshll.u32 %s5, 4
      %s51 = int_to_ptr.hbm [resolvable:$true] %s50
      %s52 = sshll.u32 [#allocation6], 4
      %s53 = int_to_ptr.vmem [resolvable:$true] %s52
      %58 = dma.hbm_to_vmem [thread:$0]  %s51, 1024, %s53, [#allocation5], 64, 64, 4
    $region25: #{mlp_forward.1} parent=1 // pred_fallthru
      _
    // Predicated region
    $region26: #{mlp_forward.1} parent=1 // pred_check
      _
    $region27: #{mlp_forward.1} parent=1 // pred_check_branch
      %60 = sbr.rel (0) target = $region29
    $region28: #{mlp_forward.1} parent=1 // pred_region
      _
    $region29: #{mlp_forward.1} parent=1 // pred_fallthru
      _
    // Predicated region
    $region30: #{mlp_forward.1} parent=1 // pred_check
      _
    $region31: #{mlp_forward.1} parent=1 // pred_check_branch
      %62 = sbr.rel (0) target = $region33
    $region32: #{mlp_forward.1} parent=1 // pred_region
      %64 = dma.done [#allocation3], 1024
    $region33: #{mlp_forward.1} parent=1 // pred_fallthru
      _
    // Predicated region
    $region34: #{mlp_forward.1} parent=1 // pred_check
      _
    $region35: #{mlp_forward.1} parent=1 // pred_check_branch
      %66 = sbr.rel (0) target = $region37
    $region36: #{mlp_forward.1} parent=1 // pred_region
      %68 = dma.done [#allocation5], 1024
    $region37: #{mlp_forward.1} parent=1 // pred_fallthru
      _
    // Predicated region
    $region38: #{mlp_forward.1} parent=1 // pred_check
      _
    $region39: #{mlp_forward.1} parent=1 // pred_check_branch
      %70 = sbr.rel (0) target = $region41
    $region40: #{mlp_forward.1} parent=1 // pred_region
      %72 = dma.done [#allocation5], 1024
    $region41: #{mlp_forward.1} parent=1 // pred_fallthru
      _
    %v73 = vld [vmem:[%s0] sm:$0xff]
    %v74 = vld [vmem:[%s0 + $0x8] sm:$0xff]
    %v75 = vpack.c.bf16 %v74, %v73
    %v76 = vld [vmem:[#allocation2] sm:$0xf]
    %v77 = vld [vmem:[#allocation2 + $0x4] sm:$0xf]
    %v78 = vld [vmem:[#allocation2 + $0x8] sm:$0xf]
    %v79 = vld [vmem:[#allocation2 + $0xc] sm:$0xf]
    %v80 = vld [vmem:[#allocation2 + $0x10] sm:$0xf]
    %v81 = vld [vmem:[#allocation2 + $0x14] sm:$0xf]
    %v82 = vld [vmem:[#allocation2 + $0x18] sm:$0xf]
    %v83 = vld [vmem:[#allocation2 + $0x1c] sm:$0xf]
    %v84 = vld [vmem:[#allocation2 + $0x20] sm:$0xf]
    %v85 = vld [vmem:[#allocation2 + $0x24] sm:$0xf]
    %v86 = vld [vmem:[#allocation2 + $0x28] sm:$0xf]
    %v87 = vld [vmem:[#allocation2 + $0x2c] sm:$0xf]
    %v88 = vld [vmem:[#allocation2 + $0x30] sm:$0xf]
    %v89 = vld [vmem:[#allocation2 + $0x34] sm:$0xf]
    %v90 = vld [vmem:[#allocation2 + $0x38] sm:$0xf]
    %v91 = vld [vmem:[#allocation2 + $0x3c] sm:$0xf]
    %v92 = vld [vmem:[%s2] sm:$0x1]
    %v94 = vperm.slane %v92, 0
    %v112 = vunpack.c.l.b16 %v76
    %v113 = vunpack.c.l.b16 %v77
    %v114 = vunpack.c.l.b16 %v78
    %v115 = vunpack.c.l.b16 %v79
    %v116 = vunpack.c.l.b16 %v80
    %v117 = vunpack.c.l.b16 %v81
    %v118 = vunpack.c.l.b16 %v82
    %v119 = vunpack.c.l.b16 %v83
    %v120 = vunpack.c.l.b16 %v84
    %v121 = vunpack.c.l.b16 %v85
    %v122 = vunpack.c.l.b16 %v86
    %v123 = vunpack.c.l.b16 %v87
    %v124 = vunpack.c.l.b16 %v88
    %v125 = vunpack.c.l.b16 %v89
    %v126 = vunpack.c.l.b16 %v90
    %v127 = vunpack.c.l.b16 %v91
    %v128 = vpack.c.b16 %v113, %v112
    %v129 = vpack.c.b16 %v115, %v114
    %v130 = vpack.c.b16 %v117, %v116
    %v131 = vpack.c.b16 %v119, %v118
    %v132 = vpack.c.b16 %v121, %v120
    %v133 = vpack.c.b16 %v123, %v122
    %v134 = vpack.c.b16 %v125, %v124
    %v135 = vpack.c.b16 %v127, %v126
    %144 = vmatpush.bf16.msra.mxu0 %v135
    %145 = vmatpush.bf16.msra.mxu0 %v134
    %146 = vmatpush.bf16.msra.mxu0 %v133
    %147 = vmatpush.bf16.msra.mxu0 %v132
    %148 = vmatpush.bf16.msra.mxu0 %v131
    %149 = vmatpush.bf16.msra.mxu0 %v130
    %150 = vmatpush.bf16.msra.mxu0 %v129
    %151 = vmatpush.bf16.msra.mxu0 %v128
    %152 = vmatmul.bf16.gmra.mxu0 %v75
    %v153 = vpop.f32.mrf.mxu0
    %v154 = vadd.f32 %v94, %v153
    %v155 = vpop.f32.mrf.mxu0
    %v156 = vadd.f32 %v94, %v155
    %157 = vdwg.mxu0
    %vm158 = vcmp.gt.f32.partialorder %v154, 0.0
    %vm159 = vcmp.gt.f32.partialorder %v156, 0.0
    %v160 = vmul.f32 %v154, 0.01
    %v161 = vmul.f32 %v156, 0.01
    %v162 = vsel %vm158, %v154, %v160
    %v163 = vsel %vm159, %v156, %v161
    %v164 = vpack.c.bf16 %v163, %v162
    %v165 = vld [vmem:[#allocation4] sm:$0xf]
    %v166 = vld [vmem:[#allocation4 + $0x4] sm:$0xf]
    %v167 = vld [vmem:[#allocation4 + $0x8] sm:$0xf]
    %v168 = vld [vmem:[#allocation4 + $0xc] sm:$0xf]
    %v169 = vld [vmem:[#allocation4 + $0x10] sm:$0xf]
    %v170 = vld [vmem:[#allocation4 + $0x14] sm:$0xf]
    %v171 = vld [vmem:[#allocation4 + $0x18] sm:$0xf]
    %v172 = vld [vmem:[#allocation4 + $0x1c] sm:$0xf]
    %v173 = vld [vmem:[#allocation4 + $0x20] sm:$0xf]
    %v174 = vld [vmem:[#allocation4 + $0x24] sm:$0xf]
    %v175 = vld [vmem:[#allocation4 + $0x28] sm:$0xf]
    %v176 = vld [vmem:[#allocation4 + $0x2c] sm:$0xf]
    %v177 = vld [vmem:[#allocation4 + $0x30] sm:$0xf]
    %v178 = vld [vmem:[#allocation4 + $0x34] sm:$0xf]
    %v179 = vld [vmem:[#allocation4 + $0x38] sm:$0xf]
    %v180 = vld [vmem:[#allocation4 + $0x3c] sm:$0xf]
    %v181 = vld [vmem:[%s4] sm:$0x1]
    %v183 = vperm.slane %v181, 0
    %v201 = vunpack.c.l.b16 %v165
    %v202 = vunpack.c.l.b16 %v166
    %v203 = vunpack.c.l.b16 %v167
    %v204 = vunpack.c.l.b16 %v168
    %v205 = vunpack.c.l.b16 %v169
    %v206 = vunpack.c.l.b16 %v170
    %v207 = vunpack.c.l.b16 %v171
    %v208 = vunpack.c.l.b16 %v172
    %v209 = vunpack.c.l.b16 %v173
    %v210 = vunpack.c.l.b16 %v174
    %v211 = vunpack.c.l.b16 %v175
    %v212 = vunpack.c.l.b16 %v176
    %v213 = vunpack.c.l.b16 %v177
    %v214 = vunpack.c.l.b16 %v178
    %v215 = vunpack.c.l.b16 %v179
    %v216 = vunpack.c.l.b16 %v180
    %v217 = vpack.c.b16 %v202, %v201
    %v218 = vpack.c.b16 %v204, %v203
    %v219 = vpack.c.b16 %v206, %v205
    %v220 = vpack.c.b16 %v208, %v207
    %v221 = vpack.c.b16 %v210, %v209
    %v222 = vpack.c.b16 %v212, %v211
    %v223 = vpack.c.b16 %v214, %v213
    %v224 = vpack.c.b16 %v216, %v215
    %233 = vmatpush.bf16.msra.mxu0 %v224
    %234 = vmatpush.bf16.msra.mxu0 %v223
    %235 = vmatpush.bf16.msra.mxu0 %v222
    %236 = vmatpush.bf16.msra.mxu0 %v221
    %237 = vmatpush.bf16.msra.mxu0 %v220
    %238 = vmatpush.bf16.msra.mxu0 %v219
    %239 = vmatpush.bf16.msra.mxu0 %v218
    %240 = vmatpush.bf16.msra.mxu0 %v217
    %241 = vmatmul.bf16.gmra.mxu0 %v164
    %v242 = vpop.f32.mrf.mxu0
    %v243 = vadd.f32 %v183, %v242
    %v244 = vpop.f32.mrf.mxu0
    %v245 = vadd.f32 %v183, %v244
    %246 = vdwg.mxu0
    %vm247 = vcmp.gt.f32.partialorder %v243, 0.0
    %vm248 = vcmp.gt.f32.partialorder %v245, 0.0
    %v249 = vmul.f32 %v243, 0.01
    %v250 = vmul.f32 %v245, 0.01
    %v251 = vsel %vm247, %v243, %v249
    %v252 = vsel %vm248, %v245, %v250
    %v253 = vpack.c.bf16 %v252, %v251
    %v254 = vld [vmem:[#allocation6] sm:$0xf]
    %v255 = vld [vmem:[#allocation6 + $0x4] sm:$0xf]
    %v256 = vld [vmem:[#allocation6 + $0x8] sm:$0xf]
    %v257 = vld [vmem:[#allocation6 + $0xc] sm:$0xf]
    %v258 = vld [vmem:[#allocation6 + $0x10] sm:$0xf]
    %v259 = vld [vmem:[#allocation6 + $0x14] sm:$0xf]
    %v260 = vld [vmem:[#allocation6 + $0x18] sm:$0xf]
    %v261 = vld [vmem:[#allocation6 + $0x1c] sm:$0xf]
    %v262 = vld [vmem:[#allocation6 + $0x20] sm:$0xf]
    %v263 = vld [vmem:[#allocation6 + $0x24] sm:$0xf]
    %v264 = vld [vmem:[#allocation6 + $0x28] sm:$0xf]
    %v265 = vld [vmem:[#allocation6 + $0x2c] sm:$0xf]
    %v266 = vld [vmem:[#allocation6 + $0x30] sm:$0xf]
    %v267 = vld [vmem:[#allocation6 + $0x34] sm:$0xf]
    %v268 = vld [vmem:[#allocation6 + $0x38] sm:$0xf]
    %v269 = vld [vmem:[#allocation6 + $0x3c] sm:$0xf]
    %v270 = vld [vmem:[%s6] sm:$0x1]
    %v272 = vperm.slane %v270, 0
    %v290 = vunpack.c.l.b16 %v254
    %v291 = vunpack.c.l.b16 %v255
    %v292 = vunpack.c.l.b16 %v256
    %v293 = vunpack.c.l.b16 %v257
    %v294 = vunpack.c.l.b16 %v258
    %v295 = vunpack.c.l.b16 %v259
    %v296 = vunpack.c.l.b16 %v260
    %v297 = vunpack.c.l.b16 %v261
    %v298 = vunpack.c.l.b16 %v262
    %v299 = vunpack.c.l.b16 %v263
    %v300 = vunpack.c.l.b16 %v264
    %v301 = vunpack.c.l.b16 %v265
    %v302 = vunpack.c.l.b16 %v266
    %v303 = vunpack.c.l.b16 %v267
    %v304 = vunpack.c.l.b16 %v268
    %v305 = vunpack.c.l.b16 %v269
    %v306 = vpack.c.b16 %v291, %v290
    %v307 = vpack.c.b16 %v293, %v292
    %v308 = vpack.c.b16 %v295, %v294
    %v309 = vpack.c.b16 %v297, %v296
    %v310 = vpack.c.b16 %v299, %v298
    %v311 = vpack.c.b16 %v301, %v300
    %v312 = vpack.c.b16 %v303, %v302
    %v313 = vpack.c.b16 %v305, %v304
    %322 = vmatpush.bf16.msra.mxu0 %v313
    %323 = vmatpush.bf16.msra.mxu0 %v312
    %324 = vmatpush.bf16.msra.mxu0 %v311
    %325 = vmatpush.bf16.msra.mxu0 %v310
    %326 = vmatpush.bf16.msra.mxu0 %v309
    %327 = vmatpush.bf16.msra.mxu0 %v308
    %328 = vmatpush.bf16.msra.mxu0 %v307
    %329 = vmatpush.bf16.msra.mxu0 %v306
    %330 = vmatmul.bf16.gmra.mxu0 %v253
    %v331 = vpop.f32.mrf.mxu0
    %v332 = vadd.f32 %v272, %v331
    %v333 = vpop.f32.mrf.mxu0
    %v334 = vadd.f32 %v272, %v333
    %335 = vdwg.mxu0
    %v336 = vand.u32 2147483647, %v332
    %v337 = vand.u32 2147483647, %v334
    %v338 = vsub.f32 0.0, %v336
    %v339 = vsub.f32 0.0, %v337
    %v340 = vmul.f32 %v338, 1.442695
    %v341 = vpow.pop %v340
    %v342 = vmul.f32 %v339, 1.442695
    %v343 = vpow.pop %v342
    %v344 = vadd.f32 %v341, 1.0
    %v345 = vadd.f32 %v343, 1.0
    %v346 = vrcp.pop %v344
    %v347 = vrcp.pop %v345
    %vm348 = vcmp.ge.f32.partialorder %v332, 0.0
    %vm349 = vcmp.ge.f32.partialorder %v334, 0.0
    %v350 = vsub.f32 1.0, %v346
    %v351 = vsub.f32 1.0, %v347
    %v352 = vsel %vm348, %v346, %v350
    %v353 = vsel %vm349, %v347, %v351
    %354 = vst [vmem:[%s7] sm:$0xff] %v352
    %355 = vst [vmem:[%s7 + $0x8] sm:$0xff] %v353
    // Predicated region
    $region42: #{mlp_forward.1} parent=1 // pred_check
      _
    $region43: #{mlp_forward.1} parent=1 // pred_check_branch
      %357 = sbr.rel (0) target = $region45
    $region44: #{mlp_forward.1} parent=1 // pred_region
      _
    $region45: #{mlp_forward.1} parent=1 // pred_fallthru
      _
    // Predicated region
    $region46: #{mlp_forward.1} parent=1 // pred_check
      _
    $region47: #{mlp_forward.1} parent=1 // pred_check_branch
      %359 = sbr.rel (0) target = $region49
    $region48: #{mlp_forward.1} parent=1 // pred_region
      _
    $region49: #{mlp_forward.1} parent=1 // pred_fallthru
      _
    %360 = vsyncpa [#allocation3], 1
    %361 = vsyncpa [#allocation5], 1

</llo_original>
